<compile_context>
chip_gen: v7x
topology: tpu7x:2x2x1
jax: 0.10.0
libtpu: 0.0.40
codegen_flags: <defaults>
</compile_context>

<pallas_src>
import jax
import jax.numpy as jnp
from jax.experimental import pallas as pl
from jax.experimental.pallas import tpu as pltpu


def _linreg_kernel(w_ref, b_ref, x_ref, o_ref):
    # w_ref / b_ref are (1, 1) SMEM scalars; x_ref / o_ref are VMEM tiles.
    w = w_ref[0, 0]
    b = b_ref[0, 0]
    y = w * x_ref[...].astype(jnp.float32) + b
    o_ref[...] = y.astype(o_ref.dtype)


def linear_regression_forward(x: jax.Array, weights: jax.Array, bias: jax.Array,
                              *, lane: int = 1024, tile_rows: int = 512) -> jax.Array:
    """y = weights * x + bias for any input shape (elementwise scalar affine)."""
    assert lane % 128 == 0 and tile_rows % 8 == 0

    orig_shape = x.shape
    total = x.size

    # Flatten and pad to a lane-dense slab: rows is a multiple of 8, last dim = lane.
    flat = x.reshape(-1)
    row_unit = 8 * lane
    padded = pl.cdiv(total, row_unit) * row_unit
    if padded != total:
        flat = jnp.pad(flat, (0, padded - total))
    rows = padded // lane
    x2d = flat.reshape(rows, lane)

    # Biggest tile that fits the data, multiple of 8 rows; partial last block is fine.
    tr = min(tile_rows, rows)
    grid = (pl.cdiv(rows, tr),)

    w_smem = weights.reshape(1, 1).astype(jnp.float32)
    b_smem = bias.reshape(1, 1).astype(jnp.float32)

    y2d = pl.pallas_call(
        _linreg_kernel,
        out_shape=jax.ShapeDtypeStruct((rows, lane), x.dtype),
        grid_spec=pltpu.PrefetchScalarGridSpec(
            num_scalar_prefetch=0,
            grid=grid,
            in_specs=[
                pl.BlockSpec(memory_space=pltpu.SMEM),        # weights (1,1)
                pl.BlockSpec(memory_space=pltpu.SMEM),        # bias    (1,1)
                pl.BlockSpec((tr, lane), lambda i: (i, 0)),   # x tile
            ],
            out_specs=pl.BlockSpec((tr, lane), lambda i: (i, 0)),
        ),
        compiler_params=pltpu.CompilerParams(
            dimension_semantics=("parallel",),
            # 2 MiB tile x (in + out) x double-buffer ≈ 8 MiB; 32 MiB leaves
            # ample headroom on all generations (incl. v7x's 64 MiB VMEM).
            vmem_limit_bytes=32 * 1024 * 1024,
        ),
    )(w_smem, b_smem, x2d)

    return y2d.reshape(-1)[:total].reshape(orig_shape)


if __name__ == "__main__":
    key = jax.random.PRNGKey(0)
    kx, kw, kb, kx2 = jax.random.split(key, 4)

    weights = jax.random.normal(kw, (1,), dtype=jnp.float32)   # torch.randn(1)
    bias = jax.random.normal(kb, (1,), dtype=jnp.float32)      # torch.randn(1)

    # Small deterministic inputs; the module is an elementwise scalar affine map.
    # Shape intentionally not (8,128)-aligned to exercise the padding path.
    x = jax.random.normal(kx, (200, 3), dtype=jnp.float32)
    y = jax.block_until_ready(linear_regression_forward(x, weights, bias))
    y_ref = weights[0] * x + bias[0]
    assert y.shape == x.shape and y.dtype == x.dtype
    assert jnp.allclose(y, y_ref, atol=1e-6, rtol=1e-6)

    # Second check on an aligned shape.
    x2 = jax.random.normal(kx2, (16, 128), dtype=jnp.float32)
    y2 = jax.block_until_ready(linear_regression_forward(x2, weights, bias))
    assert jnp.allclose(y2, weights[0] * x2 + bias[0], atol=1e-6, rtol=1e-6)

    print("KERNEL_OK")
</pallas_src>

<mosaic_0001>
module attributes {stable_mosaic.version = 11 : i64} {
  func.func @_linreg_kernel(%arg0: i32, %arg1: memref<1x1xf32, #tpu.memory_space<smem>>, %arg2: memref<1x1xf32, #tpu.memory_space<smem>>, %arg3: memref<8x1024xf32, #tpu.memory_space<vmem>>, %arg4: memref<8x1024xf32, #tpu.memory_space<vmem>>) attributes {dimension_semantics = [#tpu.dimension_semantics<parallel>], iteration_bounds = array<i64: 1>, scalar_prefetch = 0 : i64, scratch_operands = 0 : i64, tpu.core_type = #tpu.core_type<tc>, window_params = [{transform_indices = @transform_0, window_bounds = array<i64: 1, 1>}, {transform_indices = @transform_1, window_bounds = array<i64: 1, 1>}, {transform_indices = @transform_2, window_bounds = array<i64: 8, 1024>}, {transform_indices = @transform_3, window_bounds = array<i64: 8, 1024>}]} {
    %c0 = arith.constant 0 : index
    %c0_0 = arith.constant 0 : index
    %0 = memref.load %arg1[%c0, %c0_0] : memref<1x1xf32, #tpu.memory_space<smem>>
    %c0_1 = arith.constant 0 : index
    %c0_2 = arith.constant 0 : index
    %1 = memref.load %arg2[%c0_1, %c0_2] : memref<1x1xf32, #tpu.memory_space<smem>>
    %c0_3 = arith.constant 0 : index
    %c0_4 = arith.constant 0 : index
    %2 = vector.load %arg3[%c0_3, %c0_4] : memref<8x1024xf32, #tpu.memory_space<vmem>>, vector<8x1024xf32>
    %3 = vector.broadcast %0 : f32 to vector<8x1024xf32>
    %4 = arith.mulf %3, %2 : vector<8x1024xf32>
    %5 = vector.broadcast %1 : f32 to vector<8x1024xf32>
    %6 = arith.addf %4, %5 : vector<8x1024xf32>
    %c0_5 = arith.constant 0 : index
    %c0_6 = arith.constant 0 : index
    %7 = vector.load %arg4[%c0_5, %c0_6] : memref<8x1024xf32, #tpu.memory_space<vmem>>, vector<8x1024xf32>
    tpu.vector_store %arg4[%c0_5, %c0_6], %6 {strides = array<i32>} : memref<8x1024xf32, #tpu.memory_space<vmem>>, vector<8x1024xf32>,
    return
  }
  func.func @transform_0(%arg0: i32) -> (i32, i32) {
    %c0_i32 = arith.constant 0 : i32
    %c0_i32_0 = arith.constant 0 : i32
    %c0_i32_1 = arith.constant 0 : i32
    return %c0_i32, %c0_i32_0 : i32, i32
  }
  func.func @transform_1(%arg0: i32) -> (i32, i32) {
    %c0_i32 = arith.constant 0 : i32
    %c0_i32_0 = arith.constant 0 : i32
    %c0_i32_1 = arith.constant 0 : i32
    return %c0_i32, %c0_i32_0 : i32, i32
  }
  func.func @transform_2(%arg0: i32) -> (i32, i32) {
    %c0_i32 = arith.constant 0 : i32
    %c0_i32_0 = arith.constant 0 : i32
    return %arg0, %c0_i32 : i32, i32
  }
  func.func @transform_3(%arg0: i32) -> (i32, i32) {
    %c0_i32 = arith.constant 0 : i32
    %c0_i32_0 = arith.constant 0 : i32
    return %arg0, %c0_i32 : i32, i32
  }
}

</mosaic_0001>

<llo_original>
// kernel: tpu_custom_call.1
$region0: #{tpu_custom_call.1}
  #allocation0 [shape = 'u32[]', space=smem, size = 0x4, offset = 0x4, fixed_abs, tag = 'smem constant byte address 0x4 - core index']
  #allocation1 [shape = 'u32[144,128]{1,0:T(1,128)}', space=vmem, size = 0x12000, scoped, tag = 'internal scratch']
  #allocation2 [shape = 'f32[1,1]{1,0:T(1,128)S(6)}', space=smem, size = 0x200, scoped, tag = 'scoped memory for tpu_custom_call.1']
  #allocation3 [shape = 'f32[1,1]{1,0:T(1,128)S(6)}', space=smem, size = 0x200, scoped, tag = 'scoped memory for tpu_custom_call.1']
  %s0 = inlined_call_operand.<no memory space> [shape: f32[1,1], index: 0, kind: input, shape index: {}]
  %s1 = inlined_call_operand.<no memory space> [shape: f32[1,1], index: 1, kind: input, shape index: {}]
  %s2 = inlined_call_operand.hbm [shape: f32[8,1024], index: 2, kind: input, shape index: {}]
  %s3 = inlined_call_operand.hbm [shape: f32[8,1024], index: 3, kind: output, shape index: {}]
  %s4 = sld [smem:[#allocation0]]
  $region26: #{tpu_custom_call.1} parent=0
    _
  %s6 = ssub.s32 1, %s4
  %s7 = scalar_select 0, %s6, %s4
  %8 = sst [smem:[#allocation2]] %s0
  %9 = sst [smem:[#allocation3]] %s1
  $region1: #{tpu_custom_call.1} parent=0
    #allocation4 [shape = 'u8[32768]{0}', space=vmem, size = 0x8000, scoped, tag = 'input window, operand 2, single buffered']
    #allocation5 [shape = 's32[1]{0}', space=sflag, size = 0x4, scoped, tag = 'scoped memory for tpu_custom_call.1']
    #allocation6 [shape = 's32[1]{0}', space=sflag, size = 0x4, scoped, tag = 'scoped memory for tpu_custom_call.1']
    #allocation7 [shape = 'u8[32768]{0}', space=vmem, size = 0x8000, scoped, tag = 'output window, operand 0, single buffered']
    %10 = vsyncpa [#allocation5], 0
    %11 = vsyncpa [#allocation6], 0
    // Predicated region
    $region2: #{tpu_custom_call.1} parent=1 // pred_check
      _
    $region3: #{tpu_custom_call.1} parent=1 // pred_check_branch
      %13 = sbr.rel (0) target = $region5
    $region4: #{tpu_custom_call.1} parent=1 // pred_region
      _
    $region5: #{tpu_custom_call.1} parent=1 // pred_fallthru
      _
    // Predicated region
    $region6: #{tpu_custom_call.1} parent=1 // pred_check
      _
    $region7: #{tpu_custom_call.1} parent=1 // pred_check_branch
      %15 = sbr.rel (0) target = $region9
    $region8: #{tpu_custom_call.1} parent=1 // pred_region
      _
    $region9: #{tpu_custom_call.1} parent=1 // pred_fallthru
      _
    // Predicated region
    $region10: #{tpu_custom_call.1} parent=1 // pred_check
      _
    $region11: #{tpu_custom_call.1} parent=1 // pred_check_branch
      %17 = sbr.rel (0) target = $region13
    $region12: #{tpu_custom_call.1} parent=1 // pred_region
      %s19 = ssub.s32 1024, 1024
      %20 = vsyncadd [#allocation5], %s19
      %s22 = sshll.u32 [#allocation4], 4
      %s23 = int_to_ptr.vmem [resolvable:$true] %s22
      %25 = dma.hbm_to_vmem [thread:$0]  %s2, 1024, %s23, [#allocation5]
    $region13: #{tpu_custom_call.1} parent=1 // pred_fallthru
      _
    // Predicated region
    $region14: #{tpu_custom_call.1} parent=1 // pred_check
      _
    $region15: #{tpu_custom_call.1} parent=1 // pred_check_branch
      %27 = sbr.rel (0) target = $region17
    $region16: #{tpu_custom_call.1} parent=1 // pred_region
      %28 = dma.done [#allocation5], 1024
    $region17: #{tpu_custom_call.1} parent=1 // pred_fallthru
      _
    %s29 = sld [smem:[#allocation2]]
    %s30 = sld [smem:[#allocation3]]
    %v31 = vld [vmem:[#allocation4] sm:$0xff]
    %v32 = vld [vmem:[#allocation4 + $0x8] sm:$0xff]
    %v33 = vld [vmem:[#allocation4 + $0x10] sm:$0xff]
    %v34 = vld [vmem:[#allocation4 + $0x18] sm:$0xff]
    %v35 = vld [vmem:[#allocation4 + $0x20] sm:$0xff]
    %v36 = vld [vmem:[#allocation4 + $0x28] sm:$0xff]
    %v37 = vld [vmem:[#allocation4 + $0x30] sm:$0xff]
    %v38 = vld [vmem:[#allocation4 + $0x38] sm:$0xff]
    %v39 = vstv %s29
    %v40 = vmul.f32 %v39, %v31
    %v41 = vmul.f32 %v39, %v32
    %v42 = vmul.f32 %v39, %v33
    %v43 = vmul.f32 %v39, %v34
    %v44 = vmul.f32 %v39, %v35
    %v45 = vmul.f32 %v39, %v36
    %v46 = vmul.f32 %v39, %v37
    %v47 = vmul.f32 %v39, %v38
    %v48 = vstv %s30
    %v49 = vadd.f32 %v40, %v48
    %v50 = vadd.f32 %v41, %v48
    %v51 = vadd.f32 %v42, %v48
    %v52 = vadd.f32 %v43, %v48
    %v53 = vadd.f32 %v44, %v48
    %v54 = vadd.f32 %v45, %v48
    %v55 = vadd.f32 %v46, %v48
    %v56 = vadd.f32 %v47, %v48
    %57 = vst [vmem:[#allocation7] sm:$0xff] %v49
    %58 = vst [vmem:[#allocation7 + $0x8] sm:$0xff] %v50
    %59 = vst [vmem:[#allocation7 + $0x10] sm:$0xff] %v51
    %60 = vst [vmem:[#allocation7 + $0x18] sm:$0xff] %v52
    %61 = vst [vmem:[#allocation7 + $0x20] sm:$0xff] %v53
    %62 = vst [vmem:[#allocation7 + $0x28] sm:$0xff] %v54
    %63 = vst [vmem:[#allocation7 + $0x30] sm:$0xff] %v55
    %64 = vst [vmem:[#allocation7 + $0x38] sm:$0xff] %v56
    // Predicated region
    $region18: #{tpu_custom_call.1} parent=1 // pred_check
      _
    $region19: #{tpu_custom_call.1} parent=1 // pred_check_branch
      %66 = sbr.rel (0) target = $region21
    $region20: #{tpu_custom_call.1} parent=1 // pred_region
      %s68 = ssub.s32 1024, 1024
      %69 = vsyncadd [#allocation6], %s68
      %s71 = sshll.u32 [#allocation7], 4
      %s72 = int_to_ptr.vmem [resolvable:$true] %s71
      %74 = dma.vmem_to_hbm [thread:$0]  %s72, 1024, %s3, [#allocation6]
    $region21: #{tpu_custom_call.1} parent=1 // pred_fallthru
      _
    // Predicated region
    $region22: #{tpu_custom_call.1} parent=1 // pred_check
      _
    $region23: #{tpu_custom_call.1} parent=1 // pred_check_branch
      %76 = sbr.rel (0) target = $region25
    $region24: #{tpu_custom_call.1} parent=1 // pred_region
      %77 = dma.done [#allocation6], 1024
    $region25: #{tpu_custom_call.1} parent=1 // pred_fallthru
      _
    %78 = vsyncpa [#allocation5], 1
    %79 = vsyncpa [#allocation6], 1

</llo_original>
